<compile_context>
chip_gen: v5e
topology: v5e:2x2
jax: 0.10.0
libtpu: 0.0.40
codegen_flags: <defaults>
</compile_context>

<pallas_src>
import jax
import jax.numpy as jnp
from jax.experimental import pallas as pl
from jax.experimental.pallas import tpu as pltpu


def _round_up(x: int, m: int) -> int:
    return ((x + m - 1) // m) * m


_TB_CANDIDATES = (128, 256, 512, 1024)   # batch-tile caps (sublane-aligned)
_TC_CANDIDATES = (128, 256, 512, 1024)   # class-tile caps (lane-aligned)
_TK_CANDIDATES = (256, 512, 1024, 2048)  # K-tile caps (lane-aligned)


def _pick_tile(dim: int, candidates, align: int) -> int:
    """Pick a tile: cover the whole (aligned) dim in one tile if it fits under
    the largest cap, else the candidate minimizing padded size (ties -> larger
    tile for more block reuse / fewer grid steps)."""
    dim_aligned = _round_up(dim, align)
    if dim_aligned <= candidates[-1]:
        return dim_aligned
    best, best_pad = candidates[0], _round_up(dim, candidates[0])
    for t in candidates[1:]:
        pad = _round_up(dim, t)
        if pad <= best_pad:
            best, best_pad = t, pad
    return best


def _pick_divisor_tile(padded_dim: int, cap: int) -> int:
    """Largest tile <= cap that divides an already 128-aligned padded dim."""
    if padded_dim <= cap:
        return padded_dim
    for t in (2048, 1024, 512, 256, 128):
        if t <= cap and padded_dim % t == 0:
            return t
    return 128


def _ngram_linear_kernel(x_ref, wt_ref, bias_ref, o_ref):
    """out[i,j] = bias[j] + sum_k x[i,k] * wT[k,j].

    The output tile (f32) doubles as the accumulator: it is bias-initialized
    on the first K step and MXU partials are accumulated straight into it.
    """
    @pl.when(pl.program_id(2) == 0)
    def _():
        o_ref[...] = jnp.broadcast_to(bias_ref[...], o_ref.shape)

    o_ref[...] += jnp.dot(
        x_ref[...].astype(wt_ref.dtype),        # in-kernel bf16 cast (VPU)
        wt_ref[...],
        preferred_element_type=jnp.float32,
    )


def prepare_ngram_linear_params(embedding, ngram_to_class, bias, *,
                                compute_dtype=jnp.bfloat16):
    """Build the fused, transposed, padded weight once.

    Returns (w_p, bias_p):
      w_p    : [k_pad, c_pad] `compute_dtype`, zero-padded  (== W.T padded)
      bias_p : [1, c_pad] f32, zero-padded

    NOTE: hoist/cache this outside the per-step forward path; it only needs
    to be recomputed when `embedding` / `ngram_to_class` / `bias` change.
    """
    num_symbols, emb_dim = embedding.shape
    num_classes, ngram_order = ngram_to_class.shape

    tc = _pick_tile(num_classes, _TC_CANDIDATES, 128)
    tk = _pick_tile(emb_dim, _TK_CANDIDATES, 128)
    c_pad = _round_up(num_classes, tc)
    k_pad = _round_up(emb_dim, tk)

    # Fused weight built directly in the [D, C] (transposed) layout as a sum
    # of ngram_order gathers -- no [C, k, D] intermediate, no transpose pass.
    emb_t = embedding.T                                     # [D, S]
    w_t = emb_t[:, ngram_to_class[:, 0]]                    # [D, C]
    for j in range(1, ngram_order):
        w_t = w_t + emb_t[:, ngram_to_class[:, j]]
    w_t = w_t.astype(compute_dtype)
    if (k_pad, c_pad) != (emb_dim, num_classes):
        # Padded K rows MUST be zero so the reduction over padded K is exact.
        w_t = jnp.pad(w_t, ((0, k_pad - emb_dim), (0, c_pad - num_classes)))

    bias_p = jnp.zeros((1, c_pad), jnp.float32)
    bias_p = bias_p.at[0, :num_classes].set(bias.astype(jnp.float32))
    return w_t, bias_p


def ngram_linear_apply(x, w_p, bias_p, num_classes):
    """out = x @ W.T + b using the pre-fused / pre-padded weight.

    x: [..., in_dim] (any float dtype; cast to the weight dtype in-kernel).
    Returns f32 [..., num_classes].
    """
    lead_shape = x.shape[:-1]
    in_dim = x.shape[-1]
    k_pad, c_pad = w_p.shape
    assert k_pad >= in_dim and k_pad % 128 == 0 and c_pad % 128 == 0

    x2d = x.reshape(-1, in_dim)
    batch = x2d.shape[0]

    # Divisor/padding-aware tile selection.
    tb = _pick_tile(batch, _TB_CANDIDATES, 8)
    b_pad = _round_up(batch, tb)
    tk = _pick_divisor_tile(k_pad, _TK_CANDIDATES[-1])   # full K whenever <=2048
    tc = _pick_divisor_tile(c_pad, _TC_CANDIDATES[-1])

    # Megacore / v7x: make sure the parallel axes expose >=2 steps when possible.
    if b_pad // tb == 1 and c_pad // tc == 1 and tc % 256 == 0:
        tc //= 2

    # Pad x only when needed; padded regions are explicit zeros (and the
    # weight's padded K rows are zero too), so the reduction stays exact.
    if (b_pad, k_pad) != (batch, in_dim):
        x2d = jnp.pad(x2d, ((0, b_pad - batch), (0, k_pad - in_dim)))

    grid = (b_pad // tb, c_pad // tc, k_pad // tk)

    out = pl.pallas_call(
        _ngram_linear_kernel,
        out_shape=jax.ShapeDtypeStruct((b_pad, c_pad), jnp.float32),
        grid_spec=pltpu.PrefetchScalarGridSpec(
            num_scalar_prefetch=0,
            grid=grid,
            in_specs=[
                pl.BlockSpec((tb, tk), lambda i, j, k: (i, k)),   # x tile
                pl.BlockSpec((tk, tc), lambda i, j, k: (k, j)),   # W^T tile
                pl.BlockSpec((1, tc), lambda i, j, k: (0, j)),    # bias tile
            ],
            out_specs=pl.BlockSpec((tb, tc), lambda i, j, k: (i, j)),
        ),
        compiler_params=pltpu.CompilerParams(
            dimension_semantics=("parallel", "parallel", "arbitrary"),
            vmem_limit_bytes=48 * 1024 * 1024,   # fits v5e/v6e/v7x VMEM
        ),
    )(x2d, w_p, bias_p)

    out = out[:batch, :num_classes]
    return out.reshape(lead_shape + (num_classes,))


def ngram_linear(x, ngram_to_class, embedding, bias, *,
                 compute_dtype=jnp.bfloat16):
    """Convenience one-shot forward (prep + apply). For repeated forward steps
    with fixed parameters, call `prepare_ngram_linear_params` once and reuse
    its outputs with `ngram_linear_apply`."""
    num_classes = ngram_to_class.shape[0]
    w_p, bias_p = prepare_ngram_linear_params(
        embedding, ngram_to_class, bias, compute_dtype=compute_dtype)
    return ngram_linear_apply(x, w_p, bias_p, num_classes)


if __name__ == "__main__":
    # Small shapes consistent with NGramLinear defaults ('sum', tied, 0 layers).
    batch = 8
    in_dim = 32           # inner_dim = in_dim, embedding_dim = in_dim
    num_symbols = 16
    num_classes = 24
    ngram_order = 3

    key = jax.random.PRNGKey(0)
    k_x, k_emb, k_map = jax.random.split(key, 3)

    x = jax.random.normal(k_x, (batch, in_dim), dtype=jnp.float32)
    # nn.Embedding default init ~ N(0, 1)
    embedding = jax.random.normal(k_emb, (num_symbols, in_dim), dtype=jnp.float32)
    ngram_to_class = jax.random.randint(
        k_map, (num_classes, ngram_order), 0, num_symbols, dtype=jnp.int32)
    # bias.data.zero_() in __init__
    bias = jnp.zeros((num_classes,), dtype=jnp.float32)

    # Recommended usage: hoist/cache the weight prep, apply per forward step.
    w_p, bias_p = prepare_ngram_linear_params(embedding, ngram_to_class, bias)
    out = ngram_linear_apply(x, w_p, bias_p, num_classes)
    out = jax.block_until_ready(out)

    # One-shot convenience path must agree exactly (same prep, same kernel).
    out2 = jax.block_until_ready(ngram_linear(x, ngram_to_class, embedding, bias))

    # Pure-JAX references.
    weight_ref = embedding[ngram_to_class].sum(axis=1)                 # [C, D]
    ref_f32 = x @ weight_ref.T + bias[None, :]                         # exact f32
    # Reference with exactly the kernel's quantization: bf16 x, the kernel's
    # own bf16 fused weight, f32 accumulation.
    xq = x.astype(jnp.bfloat16).astype(jnp.float32)
    wq = w_p[:in_dim, :num_classes].astype(jnp.float32)
    ref_bf16 = xq @ wq + bias[None, :]

    assert out.shape == (batch, num_classes)
    assert jnp.allclose(out, out2), "prep+apply vs one-shot mismatch"
    assert jnp.allclose(out, ref_bf16, atol=1e-3, rtol=1e-3), (
        f"max abs diff vs bf16 ref {jnp.max(jnp.abs(out - ref_bf16))}")
    assert jnp.allclose(out, ref_f32, atol=1e-1, rtol=1e-1), (
        f"max abs diff vs f32 ref {jnp.max(jnp.abs(out - ref_f32))}")

    print("KERNEL_OK")
</pallas_src>

<mosaic_0001>
module attributes {stable_mosaic.version = 11 : i64} {
  func.func @_ngram_linear_kernel(%arg0: i32, %arg1: i32, %arg2: i32, %arg3: memref<8x128xf32, #tpu.memory_space<vmem>>, %arg4: memref<128x128xbf16, #tpu.memory_space<vmem>>, %arg5: memref<1x128xf32, #tpu.memory_space<vmem>>, %arg6: memref<8x128xf32, #tpu.memory_space<vmem>>) attributes {dimension_semantics = [#tpu.dimension_semantics<parallel>, #tpu.dimension_semantics<parallel>, #tpu.dimension_semantics<arbitrary>], iteration_bounds = array<i64: 1, 1, 1>, scalar_prefetch = 0 : i64, scratch_operands = 0 : i64, tpu.core_type = #tpu.core_type<tc>, window_params = [{transform_indices = @transform_0, window_bounds = array<i64: 8, 128>}, {transform_indices = @transform_1, window_bounds = array<i64: 128, 128>}, {transform_indices = @transform_2, window_bounds = array<i64: 1, 128>}, {transform_indices = @transform_3, window_bounds = array<i64: 8, 128>}]} {
    %c0_i32 = arith.constant 0 : i32
    %0 = arith.cmpi eq, %arg2, %c0_i32 : i32
    %1 = arith.extui %0 : i1 to i32
    %c0_i32_0 = arith.constant 0 : i32
    %2 = arith.cmpi ne, %1, %c0_i32_0 : i32
    scf.if %2 {
      %c0_8 = arith.constant 0 : index
      %c0_9 = arith.constant 0 : index
      %10 = vector.load %arg5[%c0_8, %c0_9] : memref<1x128xf32, #tpu.memory_space<vmem>>, vector<1x128xf32>
      %11 = vector.shape_cast %10 : vector<1x128xf32> to vector<1x128xf32>
      %12 = vector.broadcast %11 : vector<1x128xf32> to vector<8x128xf32>
      %c0_10 = arith.constant 0 : index
      %c0_11 = arith.constant 0 : index
      %13 = vector.load %arg6[%c0_10, %c0_11] : memref<8x128xf32, #tpu.memory_space<vmem>>, vector<8x128xf32>
      tpu.vector_store %arg6[%c0_10, %c0_11], %12 {strides = array<i32>} : memref<8x128xf32, #tpu.memory_space<vmem>>, vector<8x128xf32>,
    } else {
    }
    %c0 = arith.constant 0 : index
    %c0_1 = arith.constant 0 : index
    %3 = vector.load %arg6[%c0, %c0_1] : memref<8x128xf32, #tpu.memory_space<vmem>>, vector<8x128xf32>
    %c0_2 = arith.constant 0 : index
    %c0_3 = arith.constant 0 : index
    %4 = vector.load %arg3[%c0_2, %c0_3] : memref<8x128xf32, #tpu.memory_space<vmem>>, vector<8x128xf32>
    %5 = arith.truncf %4 : vector<8x128xf32> to vector<8x128xbf16>
    %c0_4 = arith.constant 0 : index
    %c0_5 = arith.constant 0 : index
    %6 = vector.load %arg4[%c0_4, %c0_5] : memref<128x128xbf16, #tpu.memory_space<vmem>>, vector<128x128xbf16>
    %cst = arith.constant dense<0.000000e+00> : vector<8x128xf32>
    %7 = tpu.matmul %5, %6, %cst {dimension_numbers = #tpu.dot_dimension_numbers<[1], [0], [0], [1], [0, 0, 1, 1], [], []>} : vector<8x128xbf16>, vector<128x128xbf16>, vector<8x128xf32> -> vector<8x128xf32>
    %8 = arith.addf %3, %7 : vector<8x128xf32>
    %c0_6 = arith.constant 0 : index
    %c0_7 = arith.constant 0 : index
    %9 = vector.load %arg6[%c0_6, %c0_7] : memref<8x128xf32, #tpu.memory_space<vmem>>, vector<8x128xf32>
    tpu.vector_store %arg6[%c0_6, %c0_7], %8 {strides = array<i32>} : memref<8x128xf32, #tpu.memory_space<vmem>>, vector<8x128xf32>,
    return
  }
  func.func @transform_0(%arg0: i32, %arg1: i32, %arg2: i32) -> (i32, i32) {
    %c0_i32 = arith.constant 0 : i32
    return %arg0, %arg2 : i32, i32
  }
  func.func @transform_1(%arg0: i32, %arg1: i32, %arg2: i32) -> (i32, i32) {
    %c0_i32 = arith.constant 0 : i32
    return %arg2, %arg1 : i32, i32
  }
  func.func @transform_2(%arg0: i32, %arg1: i32, %arg2: i32) -> (i32, i32) {
    %c0_i32 = arith.constant 0 : i32
    %c0_i32_0 = arith.constant 0 : i32
    return %c0_i32, %arg1 : i32, i32
  }
  func.func @transform_3(%arg0: i32, %arg1: i32, %arg2: i32) -> (i32, i32) {
    %c0_i32 = arith.constant 0 : i32
    return %arg0, %arg1 : i32, i32
  }
}

</mosaic_0001>

<llo_original>
// kernel: tpu_custom_call.1
$region0: #{tpu_custom_call.1}
  #allocation0 [shape = 'u32[]', space=smem, size = 0x4, offset = 0x4, fixed_abs, tag = 'smem constant byte address 0x4 - core index']
  #allocation1 [shape = 'u32[72,128]{1,0:T(1,128)}', space=vmem, size = 0x9000, scoped, tag = 'internal scratch']
  %s0 = inlined_call_operand.hbm [shape: f32[8,128], index: 0, kind: input, shape index: {}]
  %s1 = inlined_call_operand.hbm [shape: bf16[128,128], index: 1, kind: input, shape index: {}]
  %s2 = inlined_call_operand.vmem [shape: f32[1,128], index: 2, kind: input, shape index: {}]
  %s3 = inlined_call_operand.hbm [shape: f32[8,128], index: 3, kind: output, shape index: {}]
  %s4 = sld [smem:[#allocation0]]
  $region34: #{tpu_custom_call.1} parent=0
    _
  %s6 = ssub.s32 1, %s4
  %s7 = scalar_select 0, %s6, %s4
  $region1: #{tpu_custom_call.1} parent=0
    #allocation2 [shape = 'u8[4096]{0}', space=vmem, size = 0x1000, scoped, tag = 'input window, operand 0, single buffered']
    #allocation3 [shape = 's32[1]{0}', space=sflag, size = 0x4, scoped, tag = 'scoped memory for tpu_custom_call.1']
    #allocation4 [shape = 's32[1]{0}', space=sflag, size = 0x4, scoped, tag = 'scoped memory for tpu_custom_call.1']
    #allocation5 [shape = 'u8[32768]{0}', space=vmem, size = 0x8000, scoped, tag = 'input window, operand 1, single buffered']
    #allocation6 [shape = 's32[1]{0}', space=sflag, size = 0x4, scoped, tag = 'scoped memory for tpu_custom_call.1']
    #allocation7 [shape = 'u8[4096]{0}', space=vmem, size = 0x1000, scoped, tag = 'output window, operand 0, single buffered']
    %8 = vsyncpa [#allocation3], 0
    %9 = vsyncpa [#allocation6], 0
    %10 = vsyncpa [#allocation4], 0
    // Predicated region
    $region2: #{tpu_custom_call.1} parent=1 // pred_check
      _
    $region3: #{tpu_custom_call.1} parent=1 // pred_check_branch
      %12 = sbr.rel (0) target = $region5
    $region4: #{tpu_custom_call.1} parent=1 // pred_region
      %14 = vsyncadd [#allocation3], 0
      %s16 = sshll.u32 %s0, 4
      %s17 = int_to_ptr.hbm [resolvable:$true] %s16
      %s18 = sshll.u32 [#allocation2], 4
      %s19 = int_to_ptr.vmem [resolvable:$true] %s18
      %21 = dma.hbm_to_vmem [thread:$0]  %s17, 128, %s19, [#allocation3]
    $region5: #{tpu_custom_call.1} parent=1 // pred_fallthru
      _
    // Predicated region
    $region6: #{tpu_custom_call.1} parent=1 // pred_check
      _
    $region7: #{tpu_custom_call.1} parent=1 // pred_check_branch
      %23 = sbr.rel (0) target = $region9
    $region8: #{tpu_custom_call.1} parent=1 // pred_region
      %25 = vsyncadd [#allocation6], 0
      %s26 = sshll.u32 %s1, 4
      %s27 = int_to_ptr.hbm [resolvable:$true] %s26
      %s28 = sshll.u32 [#allocation5], 4
      %s29 = int_to_ptr.vmem [resolvable:$true] %s28
      %34 = dma.hbm_to_vmem [thread:$0]  %s27, 1024, %s29, [#allocation6], 64, 64, 4
    $region9: #{tpu_custom_call.1} parent=1 // pred_fallthru
      _
    // Predicated region
    $region10: #{tpu_custom_call.1} parent=1 // pred_check
      _
    $region11: #{tpu_custom_call.1} parent=1 // pred_check_branch
      %36 = sbr.rel (0) target = $region13
    $region12: #{tpu_custom_call.1} parent=1 // pred_region
      _
    $region13: #{tpu_custom_call.1} parent=1 // pred_fallthru
      _
    // Predicated region
    $region14: #{tpu_custom_call.1} parent=1 // pred_check
      _
    $region15: #{tpu_custom_call.1} parent=1 // pred_check_branch
      %38 = sbr.rel (0) target = $region17
    $region16: #{tpu_custom_call.1} parent=1 // pred_region
      %40 = dma.done [#allocation3], 128
    $region17: #{tpu_custom_call.1} parent=1 // pred_fallthru
      _
    // Predicated region
    $region18: #{tpu_custom_call.1} parent=1 // pred_check
      _
    $region19: #{tpu_custom_call.1} parent=1 // pred_check_branch
      %42 = sbr.rel (0) target = $region21
    $region20: #{tpu_custom_call.1} parent=1 // pred_region
      %44 = dma.done [#allocation6], 1024
    $region21: #{tpu_custom_call.1} parent=1 // pred_fallthru
      _
    %p45 = scmp.eq.s32.totalorder 0, 0
    // Predicated region
    $region22: #{tpu_custom_call.1} parent=1 // pred_check
      %p46 = pneg %p45
    $region23: #{tpu_custom_call.1} parent=1 // pred_check_branch
      %48 = sbr.rel (%p46) target = $region25
    $region24: #{tpu_custom_call.1} parent=1 // pred_region
      %v49 = vld [vmem:[%s2] sm:$0x1]
      %v51 = vperm.slane %v49, 0
      %53 = vst [vmem:[#allocation7] sm:$0xff] %v51
    $region25: #{tpu_custom_call.1} parent=1 // pred_fallthru
      _
    %v54 = vld [vmem:[#allocation7] sm:$0xff]
    %v55 = vld [vmem:[#allocation2] sm:$0xff]
    %v56 = vpack.c.bf16 %v55, %v55
    %v57 = vld [vmem:[#allocation5] sm:$0xf]
    %v58 = vld [vmem:[#allocation5 + $0x4] sm:$0xf]
    %v59 = vld [vmem:[#allocation5 + $0x8] sm:$0xf]
    %v60 = vld [vmem:[#allocation5 + $0xc] sm:$0xf]
    %v61 = vld [vmem:[#allocation5 + $0x10] sm:$0xf]
    %v62 = vld [vmem:[#allocation5 + $0x14] sm:$0xf]
    %v63 = vld [vmem:[#allocation5 + $0x18] sm:$0xf]
    %v64 = vld [vmem:[#allocation5 + $0x1c] sm:$0xf]
    %v65 = vld [vmem:[#allocation5 + $0x20] sm:$0xf]
    %v66 = vld [vmem:[#allocation5 + $0x24] sm:$0xf]
    %v67 = vld [vmem:[#allocation5 + $0x28] sm:$0xf]
    %v68 = vld [vmem:[#allocation5 + $0x2c] sm:$0xf]
    %v69 = vld [vmem:[#allocation5 + $0x30] sm:$0xf]
    %v70 = vld [vmem:[#allocation5 + $0x34] sm:$0xf]
    %v71 = vld [vmem:[#allocation5 + $0x38] sm:$0xf]
    %v72 = vld [vmem:[#allocation5 + $0x3c] sm:$0xf]
    %v89 = vunpack.c.l.b16 %v57
    %v90 = vunpack.c.l.b16 %v58
    %v91 = vunpack.c.l.b16 %v59
    %v92 = vunpack.c.l.b16 %v60
    %v93 = vunpack.c.l.b16 %v61
    %v94 = vunpack.c.l.b16 %v62
    %v95 = vunpack.c.l.b16 %v63
    %v96 = vunpack.c.l.b16 %v64
    %v97 = vunpack.c.l.b16 %v65
    %v98 = vunpack.c.l.b16 %v66
    %v99 = vunpack.c.l.b16 %v67
    %v100 = vunpack.c.l.b16 %v68
    %v101 = vunpack.c.l.b16 %v69
    %v102 = vunpack.c.l.b16 %v70
    %v103 = vunpack.c.l.b16 %v71
    %v104 = vunpack.c.l.b16 %v72
    %v105 = vpack.c.b16 %v90, %v89
    %v106 = vpack.c.b16 %v92, %v91
    %v107 = vpack.c.b16 %v94, %v93
    %v108 = vpack.c.b16 %v96, %v95
    %v109 = vpack.c.b16 %v98, %v97
    %v110 = vpack.c.b16 %v100, %v99
    %v111 = vpack.c.b16 %v102, %v101
    %v112 = vpack.c.b16 %v104, %v103
    %121 = vmatpush.bf16.msra.mxu0 %v112
    %122 = vmatpush.bf16.msra.mxu0 %v111
    %123 = vmatpush.bf16.msra.mxu0 %v110
    %124 = vmatpush.bf16.msra.mxu0 %v109
    %125 = vmatpush.bf16.msra.mxu0 %v108
    %126 = vmatpush.bf16.msra.mxu0 %v107
    %127 = vmatpush.bf16.msra.mxu0 %v106
    %128 = vmatpush.bf16.msra.mxu0 %v105
    %129 = vmatmul.bf16.gmra.mxu0 %v56
    %v130 = vpop.f32.mrf.mxu0
    %v131 = vadd.f32 0.0, %v130
    %v132 = vpop.f32.mrf.mxu0
    %133 = vdwg.mxu0
    %v134 = vadd.f32 %v54, %v131
    %135 = vst [vmem:[#allocation7] sm:$0xff] %v134
    // Predicated region
    $region26: #{tpu_custom_call.1} parent=1 // pred_check
      _
    $region27: #{tpu_custom_call.1} parent=1 // pred_check_branch
      %137 = sbr.rel (0) target = $region29
    $region28: #{tpu_custom_call.1} parent=1 // pred_region
      %139 = vsyncadd [#allocation4], 0
      %s141 = sshll.u32 [#allocation7], 4
      %s142 = int_to_ptr.vmem [resolvable:$true] %s141
      %s143 = sshll.u32 %s3, 4
      %s144 = int_to_ptr.hbm [resolvable:$true] %s143
      %146 = dma.vmem_to_hbm [thread:$0]  %s142, 128, %s144, [#allocation4]
    $region29: #{tpu_custom_call.1} parent=1 // pred_fallthru
      _
    // Predicated region
    $region30: #{tpu_custom_call.1} parent=1 // pred_check
      _
    $region31: #{tpu_custom_call.1} parent=1 // pred_check_branch
      %148 = sbr.rel (0) target = $region33
    $region32: #{tpu_custom_call.1} parent=1 // pred_region
      %150 = dma.done [#allocation4], 128
    $region33: #{tpu_custom_call.1} parent=1 // pred_fallthru
      _
    %151 = vsyncpa [#allocation3], 1
    %152 = vsyncpa [#allocation6], 1
    %153 = vsyncpa [#allocation4], 1

</llo_original>
